<compile_context>
chip_gen: v7x
topology: tpu7x:2x2x1
jax: 0.10.0
libtpu: 0.0.40
codegen_flags: <defaults>
</compile_context>

<pallas_src>
import numpy as np
import jax
import jax.numpy as jnp
from jax.experimental import pallas as pl
from jax.experimental.pallas import tpu as pltpu

_F32_MAX = float(np.finfo(np.float32).max)
_F32_MIN = float(np.finfo(np.float32).min)


def _round_up(a, b):
    return (a + b - 1) // b * b


def _weight_range_kernel(x_ref, w_ref, o_ref):
    """One grid step over a block of flattened (b, g) rows.

    x_ref : (TR, SP) f32 VMEM   TR rows = (b, g) pairs, SP = lane-padded prod(spatial)
    w_ref : (TR, 1)  f32 VMEM   per-row target weight (already sqrt'd if 'w_K_w')
    o_ref : (8, 128) f32 VMEM   partial sums for this block (summed in the wrapper)
    """
    diff = x_ref[...] - w_ref[...]                 # lane-broadcast of per-row weight
    sq = diff * diff
    # mermaid utils.remove_infs_from_variable == clamp to the finite f32 range
    sq = jnp.clip(sq, _F32_MIN, _F32_MAX)
    total = jnp.sum(sq)                            # one cross-lane reduce per block
    r = jax.lax.broadcasted_iota(jnp.int32, (8, 128), 0)
    c = jax.lax.broadcasted_iota(jnp.int32, (8, 128), 1)
    o_ref[...] = jnp.where((r == 0) & (c == 0), total, 0.0)


def weight_range_loss(x, spacing, weights, *, is_w_K_w=False, block_rows=64):
    """loss = remove_infs((x - w.view(1,G,1,..,1))**2).sum() * spacing.prod()."""
    x = x.astype(jnp.float32)
    weights = weights.astype(jnp.float32)
    spacing = jnp.asarray(spacing, dtype=jnp.float32)
    if is_w_K_w:
        weights = jnp.sqrt(weights)

    B, G = x.shape[0], x.shape[1]
    spatial = int(np.prod(x.shape[2:]))
    rows = B * G

    # Lane-dense flattening: (B, G, *spatial) -> (B*G, spatial)
    x_flat = x.reshape(rows, spatial)
    w_rows = jnp.broadcast_to(weights[None, :], (B, G)).reshape(rows, 1)

    # Pad the minor (lane) dim to a multiple of 128 with the row's own weight
    # so padded entries contribute (w - w)^2 == 0.
    sp_p = _round_up(spatial, 128)
    if sp_p != spatial:
        x_flat = jnp.concatenate(
            [x_flat, jnp.broadcast_to(w_rows, (rows, sp_p - spatial))], axis=1)

    # Pad rows to a multiple of the block size with x == w == 0 rows (zero diff).
    tr = _round_up(max(8, min(block_rows, rows)), 8)
    rows_p = _round_up(rows, tr)
    if rows_p != rows:
        x_flat = jnp.concatenate(
            [x_flat, jnp.zeros((rows_p - rows, sp_p), jnp.float32)], axis=0)
        w_rows = jnp.concatenate(
            [w_rows, jnp.zeros((rows_p - rows, 1), jnp.float32)], axis=0)

    nblocks = rows_p // tr
    partials = pl.pallas_call(
        _weight_range_kernel,
        out_shape=jax.ShapeDtypeStruct((nblocks * 8, 128), jnp.float32),
        grid=(nblocks,),
        in_specs=[
            pl.BlockSpec((tr, sp_p), lambda i: (i, 0)),   # x rows block
            pl.BlockSpec((tr, 1), lambda i: (i, 0)),      # per-row weights
        ],
        out_specs=pl.BlockSpec((8, 128), lambda i: (i, 0)),
        compiler_params=pltpu.CompilerParams(
            dimension_semantics=("parallel",)),           # independent blocks (megacore-friendly)
    )(x_flat, w_rows)

    vol = jnp.prod(spacing)                               # constants folded: applied once
    return jnp.sum(partials) * vol


class WeightRangeLossPallas:
    """JAX/Pallas port of mermaid WeightRangeLoss (forward pass)."""

    def __init__(self, dim, decay_factor, weight_type):
        self.dim = dim
        self.decay_factor = decay_factor
        self.is_w_K_w = weight_type == 'w_K_w'

    def forward(self, x, spacing, weights):
        assert x.ndim == 2 + self.dim, "x must be (B, len(weights), *spatial[dim])"
        return weight_range_loss(x, spacing, weights, is_w_K_w=self.is_w_K_w)

    __call__ = forward

    def cal_weights_for_weightrange(self, epoch):
        # Pure-Python scheduling helper (no tensor math) — kept verbatim.
        def sigmoid_decay(ep, static=5, k=5):
            if ep < static:
                return float(1.0)
            ep = ep - static
            return float(k / (k + np.exp(ep / k)))
        return max(sigmoid_decay(epoch, static=10, k=self.decay_factor), 0.1)


if __name__ == "__main__":
    key = jax.random.PRNGKey(0)
    B, G, H, W = 2, 4, 16, 16
    dim = 2

    k1, k2 = jax.random.split(key)
    x = jax.random.uniform(k1, (B, G, H, W), dtype=jnp.float32)
    weights = jax.random.uniform(k2, (G,), dtype=jnp.float32, minval=0.05, maxval=1.0)
    spacing = jnp.array([1.0 / (H - 1), 1.0 / (W - 1)], dtype=jnp.float32)

    loss_mod = WeightRangeLossPallas(dim=dim, decay_factor=5.0, weight_type='w_K_w')
    loss = loss_mod(x, spacing, weights)
    jax.block_until_ready(loss)

    # Pure-JAX reference (mirrors the PyTorch forward).
    w_eff = jnp.sqrt(weights)
    ref = jnp.sum(jnp.clip((x - w_eff.reshape(1, G, 1, 1)) ** 2, _F32_MIN, _F32_MAX)) \
        * jnp.prod(spacing)

    assert loss.shape == () and bool(jnp.isfinite(loss))
    np.testing.assert_allclose(np.asarray(loss), np.asarray(ref), rtol=1e-5, atol=1e-6)
    print("KERNEL_OK")
</pallas_src>

<mosaic_0001>
module attributes {stable_mosaic.version = 11 : i64} {
  func.func @_weight_range_kernel(%arg0: i32, %arg1: memref<8x256xf32, #tpu.memory_space<vmem>>, %arg2: memref<8x1xf32, #tpu.memory_space<vmem>>, %arg3: memref<8x128xf32, #tpu.memory_space<vmem>>) attributes {dimension_semantics = [#tpu.dimension_semantics<parallel>], iteration_bounds = array<i64: 1>, scalar_prefetch = 0 : i64, scratch_operands = 0 : i64, tpu.core_type = #tpu.core_type<tc>, window_params = [{transform_indices = @transform_0, window_bounds = array<i64: 8, 256>}, {transform_indices = @transform_1, window_bounds = array<i64: 8, 1>}, {transform_indices = @transform_2, window_bounds = array<i64: 8, 128>}]} {
    %c0 = arith.constant 0 : index
    %c0_0 = arith.constant 0 : index
    %0 = vector.load %arg1[%c0, %c0_0] : memref<8x256xf32, #tpu.memory_space<vmem>>, vector<8x256xf32>
    %c0_1 = arith.constant 0 : index
    %c0_2 = arith.constant 0 : index
    %1 = vector.load %arg2[%c0_1, %c0_2] : memref<8x1xf32, #tpu.memory_space<vmem>>, vector<8x1xf32>
    %2 = vector.broadcast %1 : vector<8x1xf32> to vector<8x256xf32>
    %3 = arith.subf %0, %2 : vector<8x256xf32>
    %4 = arith.mulf %3, %3 : vector<8x256xf32>
    %cst = arith.constant -3.40282347E+38 : f32
    %cst_3 = arith.constant 3.40282347E+38 : f32
    %5 = vector.broadcast %cst : f32 to vector<8x256xf32>
    %6 = arith.maximumf %5, %4 : vector<8x256xf32>
    %7 = vector.broadcast %cst_3 : f32 to vector<8x256xf32>
    %8 = arith.minimumf %7, %6 : vector<8x256xf32>
    %9 = vector.shape_cast %8 : vector<8x256xf32> to vector<1x8x256xf32>
    %cst_4 = arith.constant dense<0.000000e+00> : vector<1xf32>
    %10 = vector.multi_reduction <add>, %9, %cst_4 [1, 2] : vector<1x8x256xf32> to vector<1xf32>
    %11 = vector.shape_cast %10 : vector<1xf32> to vector<1x1x1xf32>
    %12 = vector.extract %11[0, 0, 0] : f32 from vector<1x1x1xf32>
    %13 = tpu.iota {dimensions = array<i32: 0>} : vector<8x128xi32>
    %14 = tpu.iota {dimensions = array<i32: 1>} : vector<8x128xi32>
    %c0_i32 = arith.constant 0 : i32
    %15 = vector.broadcast %c0_i32 : i32 to vector<8x128xi32>
    %16 = arith.cmpi eq, %13, %15 : vector<8x128xi32>
    %c0_i32_5 = arith.constant 0 : i32
    %17 = vector.broadcast %c0_i32_5 : i32 to vector<8x128xi32>
    %18 = arith.cmpi eq, %14, %17 : vector<8x128xi32>
    %19 = arith.andi %16, %18 : vector<8x128xi1>
    %cst_6 = arith.constant 0.000000e+00 : f32
    %20 = vector.broadcast %12 : f32 to vector<8x128xf32>
    %21 = vector.broadcast %cst_6 : f32 to vector<8x128xf32>
    %22 = arith.select %19, %20, %21 : vector<8x128xi1>, vector<8x128xf32>
    %c0_7 = arith.constant 0 : index
    %c0_8 = arith.constant 0 : index
    %23 = vector.load %arg3[%c0_7, %c0_8] : memref<8x128xf32, #tpu.memory_space<vmem>>, vector<8x128xf32>
    tpu.vector_store %arg3[%c0_7, %c0_8], %22 {strides = array<i32>} : memref<8x128xf32, #tpu.memory_space<vmem>>, vector<8x128xf32>,
    return
  }
  func.func @transform_0(%arg0: i32) -> (i32, i32) {
    %c0_i32 = arith.constant 0 : i32
    %c0_i32_0 = arith.constant 0 : i32
    return %arg0, %c0_i32 : i32, i32
  }
  func.func @transform_1(%arg0: i32) -> (i32, i32) {
    %c0_i32 = arith.constant 0 : i32
    %c0_i32_0 = arith.constant 0 : i32
    return %arg0, %c0_i32 : i32, i32
  }
  func.func @transform_2(%arg0: i32) -> (i32, i32) {
    %c0_i32 = arith.constant 0 : i32
    %c0_i32_0 = arith.constant 0 : i32
    return %arg0, %c0_i32 : i32, i32
  }
}

</mosaic_0001>

<llo_original>
// kernel: tpu_custom_call.1
$region0: #{tpu_custom_call.1}
  #allocation0 [shape = 'u32[]', space=smem, size = 0x4, offset = 0x4, fixed_abs, tag = 'smem constant byte address 0x4 - core index']
  #allocation1 [shape = 'u32[144,128]{1,0:T(1,128)}', space=vmem, size = 0x12000, scoped, tag = 'internal scratch']
  %s0 = inlined_call_operand.hbm [shape: f32[8,256], index: 0, kind: input, shape index: {}]
  %s1 = inlined_call_operand.vmem [shape: f32[8,1], index: 1, kind: input, shape index: {}]
  %s2 = inlined_call_operand.hbm [shape: f32[8,128], index: 2, kind: output, shape index: {}]
  %s3 = sld [smem:[#allocation0]]
  $region22: #{tpu_custom_call.1} parent=0
    _
  %s5 = ssub.s32 1, %s3
  %s6 = scalar_select 0, %s5, %s3
  $region1: #{tpu_custom_call.1} parent=0
    #allocation2 [shape = 'u8[8192]{0}', space=vmem, size = 0x2000, scoped, tag = 'input window, operand 0, single buffered']
    #allocation3 [shape = 's32[1]{0}', space=sflag, size = 0x4, scoped, tag = 'scoped memory for tpu_custom_call.1']
    #allocation4 [shape = 's32[1]{0}', space=sflag, size = 0x4, scoped, tag = 'scoped memory for tpu_custom_call.1']
    #allocation5 [shape = 'u8[4096]{0}', space=vmem, size = 0x1000, scoped, tag = 'output window, operand 0, single buffered']
    %7 = vsyncpa [#allocation3], 0
    %8 = vsyncpa [#allocation4], 0
    // Predicated region
    $region2: #{tpu_custom_call.1} parent=1 // pred_check
      _
    $region3: #{tpu_custom_call.1} parent=1 // pred_check_branch
      %10 = sbr.rel (0) target = $region5
    $region4: #{tpu_custom_call.1} parent=1 // pred_region
      %s12 = ssub.s32 256, 256
      %13 = vsyncadd [#allocation3], %s12
      %s15 = sshll.u32 [#allocation2], 4
      %s16 = int_to_ptr.vmem [resolvable:$true] %s15
      %18 = dma.hbm_to_vmem [thread:$0]  %s0, 256, %s16, [#allocation3]
    $region5: #{tpu_custom_call.1} parent=1 // pred_fallthru
      _
    // Predicated region
    $region6: #{tpu_custom_call.1} parent=1 // pred_check
      _
    $region7: #{tpu_custom_call.1} parent=1 // pred_check_branch
      %20 = sbr.rel (0) target = $region9
    $region8: #{tpu_custom_call.1} parent=1 // pred_region
      _
    $region9: #{tpu_custom_call.1} parent=1 // pred_fallthru
      _
    // Predicated region
    $region10: #{tpu_custom_call.1} parent=1 // pred_check
      _
    $region11: #{tpu_custom_call.1} parent=1 // pred_check_branch
      %22 = sbr.rel (0) target = $region13
    $region12: #{tpu_custom_call.1} parent=1 // pred_region
      %23 = dma.done [#allocation3], 256
    $region13: #{tpu_custom_call.1} parent=1 // pred_fallthru
      _
    %v24 = vld [vmem:[#allocation2] sm:$0xff]
    %v25 = vld [vmem:[#allocation2 + $0x8] sm:$0xff]
    %v26 = vld [vmem:[%s1] sm:$0xff]
    %28 = vset.pattern.permute.xlu0 0
    %29 = vperm.xlu0 %28, %v26
    %v30 = vpop.permute.xlu0 %29
    %v32 = vsub.f32 %v24, %v30
    %v33 = vsub.f32 %v25, %v30
    %v34 = vmul.f32 %v32, %v32
    %v35 = vmul.f32 %v33, %v33
    %v36 = vmax.f32 %v34, -3.4028235e+38
    %v37 = vmax.f32 %v35, -3.4028235e+38
    %v38 = vmin.f32 %v36, 3.4028235e+38
    %v39 = vmin.f32 %v37, 3.4028235e+38
    %v40 = vadd.f32 %v38, %v39
    %41 = vadd.xlane.f32.xlu0 %v40
    %v42 = vpop.xlane.xlu0 %41
    %v43 = vrot.slane %v42, 4
    %v44 = vadd.f32 %v42, %v43
    %v45 = vrot.slane %v44, 2
    %v46 = vadd.f32 %v44, %v45
    %v47 = vrot.slane %v46, 1
    %v48 = vadd.f32 %v46, %v47
    %s49 = vtos %v48
    %v50 = vlaneseq
    %v51 = vshrl.u32 %v50, 7
    %v52 = vlaneseq
    %v53 = vand.u32 %v52, 127
    %vm54 = vcmp.eq.s32.totalorder %v51, 0
    %vm55 = vcmp.eq.s32.totalorder %v53, 0
    %vm56 = vmand %vm54, %vm55
    %v57 = vstv %s49
    %v58 = vsel %vm56, %v57, 0.0
    %59 = vst [vmem:[#allocation5] sm:$0xff] %v58
    // Predicated region
    $region14: #{tpu_custom_call.1} parent=1 // pred_check
      _
    $region15: #{tpu_custom_call.1} parent=1 // pred_check_branch
      %61 = sbr.rel (0) target = $region17
    $region16: #{tpu_custom_call.1} parent=1 // pred_region
      %s63 = ssub.s32 128, 128
      %64 = vsyncadd [#allocation4], %s63
      %s66 = sshll.u32 [#allocation5], 4
      %s67 = int_to_ptr.vmem [resolvable:$true] %s66
      %69 = dma.vmem_to_hbm [thread:$0]  %s67, 128, %s2, [#allocation4]
    $region17: #{tpu_custom_call.1} parent=1 // pred_fallthru
      _
    // Predicated region
    $region18: #{tpu_custom_call.1} parent=1 // pred_check
      _
    $region19: #{tpu_custom_call.1} parent=1 // pred_check_branch
      %71 = sbr.rel (0) target = $region21
    $region20: #{tpu_custom_call.1} parent=1 // pred_region
      %72 = dma.done [#allocation4], 128
    $region21: #{tpu_custom_call.1} parent=1 // pred_fallthru
      _
    %73 = vsyncpa [#allocation3], 1
    %74 = vsyncpa [#allocation4], 1

</llo_original>
